<compile_context>
chip_gen: v6e
topology: v6e:2x2x1
jax: 0.10.0
libtpu: 0.0.40
codegen_flags: <defaults>
</compile_context>

<pallas_src>
import functools
import math

import jax
import jax.numpy as jnp
from jax import lax
from jax.experimental import pallas as pl
from jax.experimental.pallas import tpu as pltpu

_MIB = 1024 * 1024


def _is_pre_v6_tpu():
    """True on TPU v5 and older (no bf16 VPU/EUP, 128-wide MXU)."""
    try:
        kind = jax.devices()[0].device_kind.lower()
    except Exception:
        return False
    return any(t in kind for t in ("v2", "v3", "v4", "v5"))


def _resident_spec(shape, index_map):
    """Single-buffered BlockSpec for grid-invariant (resident) operands."""
    try:
        return pl.BlockSpec(shape, index_map, pipeline_mode=pl.Buffered(1))
    except (TypeError, ValueError):
        return pl.BlockSpec(shape, index_map)


def _vmem_limit(n_bytes):
    # Floor at the v6e/v7x default scoped limit, cap at v7x per-TC physical.
    return int(min(max(n_bytes + 4 * _MIB, 32 * _MIB), 64 * _MIB))


# ----------------------------------------------------------------------------
# Kernel 1: fused QKV projection.
#   y = x @ Wqkv_t + b   (bf16 MXU inputs, f32 accumulate), split into three
#   bf16 (N, D) outputs.  Q's weight/bias carry the 1/sqrt(Dh) scale already.
# ----------------------------------------------------------------------------
def _qkv_kernel(x_ref, w_ref, b_ref, q_ref, k_ref, v_ref, *, d):
    x = x_ref[...].astype(jnp.bfloat16)
    y = jnp.dot(x, w_ref[...], preferred_element_type=jnp.float32) + b_ref[...]
    q_ref[...] = y[:, :d].astype(q_ref.dtype)
    k_ref[...] = y[:, d:2 * d].astype(k_ref.dtype)
    v_ref[...] = y[:, 2 * d:].astype(v_ref.dtype)


def qkv_projection_pallas(x2d, wqkv_t_bf16, bqkv_f32, *, row_tile=256):
    """x2d: (N, D) f32; wqkv_t_bf16: (D, 3D) bf16; bqkv_f32: (1, 3D) f32."""
    n, d_in = x2d.shape
    d_out3 = wqkv_t_bf16.shape[1]
    d = d_out3 // 3
    if n <= row_tile:
        rt, n_pad = n, n
    else:
        rt = row_tile
        n_pad = ((n + rt - 1) // rt) * rt
    x_p = x2d if n_pad == n else jnp.pad(x2d, ((0, n_pad - n), (0, 0)))

    vmem = (d_in * d_out3 * 2 + d_out3 * 4            # resident weight + bias
            + 2 * rt * d_in * x_p.dtype.itemsize      # double-buffered x tile
            + 3 * 2 * rt * d * 2                      # 3 bf16 outputs x2
            + 2 * rt * d_out3 * 4)                    # f32 matmul temporaries

    out_sds = jax.ShapeDtypeStruct((n_pad, d), jnp.bfloat16)
    out_spec = pl.BlockSpec((rt, d), lambda i: (i, 0))
    q, k, v = pl.pallas_call(
        functools.partial(_qkv_kernel, d=d),
        out_shape=(out_sds, out_sds, out_sds),
        grid=(n_pad // rt,),
        in_specs=[
            pl.BlockSpec((rt, d_in), lambda i: (i, 0)),
            _resident_spec((d_in, d_out3), lambda i: (0, 0)),
            _resident_spec((1, d_out3), lambda i: (0, 0)),
        ],
        out_specs=(out_spec, out_spec, out_spec),
        compiler_params=pltpu.CompilerParams(
            dimension_semantics=("parallel",),
            vmem_limit_bytes=_vmem_limit(vmem)),
    )(x_p, wqkv_t_bf16, bqkv_f32)
    if n_pad != n:
        q, k, v = q[:n], k[:n], v[:n]
    return q, k, v


# ----------------------------------------------------------------------------
# Kernel 2: plain linear  y = x @ Wt + b  (used for the output projection).
# ----------------------------------------------------------------------------
def _linear_kernel(x_ref, wt_ref, b_ref, o_ref):
    x = x_ref[...].astype(jnp.bfloat16)
    y = jnp.dot(x, wt_ref[...], preferred_element_type=jnp.float32) + b_ref[...]
    o_ref[...] = y.astype(o_ref.dtype)


def linear_pallas(x2d, wt_bf16, b2_f32, *, out_dtype, row_tile=256):
    n, d_in = x2d.shape
    d_out = wt_bf16.shape[1]
    if n <= row_tile:
        rt, n_pad = n, n
    else:
        rt = row_tile
        n_pad = ((n + rt - 1) // rt) * rt
    x_p = x2d if n_pad == n else jnp.pad(x2d, ((0, n_pad - n), (0, 0)))

    vmem = (d_in * d_out * 2 + d_out * 4
            + 2 * rt * d_in * x_p.dtype.itemsize
            + 2 * rt * d_out * jnp.dtype(out_dtype).itemsize
            + rt * d_out * 4)

    out = pl.pallas_call(
        _linear_kernel,
        out_shape=jax.ShapeDtypeStruct((n_pad, d_out), out_dtype),
        grid=(n_pad // rt,),
        in_specs=[
            pl.BlockSpec((rt, d_in), lambda i: (i, 0)),
            _resident_spec((d_in, d_out), lambda i: (0, 0)),
            _resident_spec((1, d_out), lambda i: (0, 0)),
        ],
        out_specs=pl.BlockSpec((rt, d_out), lambda i: (i, 0)),
        compiler_params=pltpu.CompilerParams(
            dimension_semantics=("parallel",),
            vmem_limit_bytes=_vmem_limit(vmem)),
    )(x_p, wt_bf16, b2_f32)
    return out[:n] if n_pad != n else out


# ----------------------------------------------------------------------------
# Kernel 3: attention over a (batch, head-group) grid.
# Q/K/V arrive as (B, S, D) bf16 (Q pre-scaled); each grid point reads a
# (1, S, g*Dh) column slab and writes ctx directly into (B, S, D) layout.
# ----------------------------------------------------------------------------
def _attn_kernel(q_ref, k_ref, v_ref, o_ref, *p_refs, g, dh, exp_dtype):
    qt = q_ref[0]                         # (S, g*Dh) bf16, already scaled
    kt = k_ref[0]
    vt = v_ref[0]
    ctx_parts = []
    for hh in range(g):                   # static unroll over the head group
        sl = slice(hh * dh, (hh + 1) * dh)
        q = qt[:, sl]
        k = kt[:, sl]
        v = vt[:, sl]
        # Q @ K^T without materializing a transpose (contract last dims).
        s = lax.dot_general(q, k, (((1,), (1,)), ((), ())),
                            preferred_element_type=jnp.float32)       # (S, S)
        s = s - jnp.max(s, axis=-1, keepdims=True)
        e = jnp.exp(s.astype(exp_dtype)).astype(jnp.float32)
        # Exact per-row reciprocal (cheap: S values) so user-visible probs
        # sum to 1; the same probs drive ctx.
        p = e * (1.0 / jnp.sum(e, axis=-1, keepdims=True))
        ctx_parts.append(
            jnp.dot(p.astype(jnp.bfloat16), v,
                    preferred_element_type=jnp.float32).astype(o_ref.dtype))
        if p_refs:                         # probs output only when vis=True
            p_refs[0][0, hh] = p.astype(p_refs[0].dtype)
    # Single lane-dense store of the whole head-group slab.
    o_ref[0] = ctx_parts[0] if g == 1 else jnp.concatenate(ctx_parts, axis=-1)


def _pick_head_group(num_heads, dh, prefer_wide):
    if dh % 128 == 0:
        return 1                                      # one head is lane-dense
    targets = (256, 128) if prefer_wide else (128, 256)
    for tgt in targets:
        if tgt % dh == 0:
            g = tgt // dh
            if num_heads % g == 0:
                return g
    return num_heads                                  # small-model fallback


def attention_pallas(q, k, v, *, num_heads, head_size, vis,
                     probs_dtype=jnp.float32, exp_dtype=jnp.float32,
                     head_group=None):
    """q/k/v: (B, S, D) bf16 (Q pre-scaled) -> ctx (B, S, D) bf16 [, probs]."""
    b, s, d = q.shape
    h, dh = num_heads, head_size
    g = head_group if head_group is not None else _pick_head_group(
        h, dh, prefer_wide=not _is_pre_v6_tpu())
    cb = g * dh
    grid = (b, h // g)

    qkv_spec = pl.BlockSpec((1, s, cb), lambda i, j: (i, 0, j))
    ctx_shape = jax.ShapeDtypeStruct((b, s, d), jnp.bfloat16)
    ctx_spec = pl.BlockSpec((1, s, cb), lambda i, j: (i, 0, j))

    vmem = (3 * 2 * s * cb * 2          # q/k/v input tiles (double-buffered)
            + 2 * s * cb * 2            # ctx output tile
            + 6 * s * s * 4)            # score / exp / prob temporaries
    if vis:
        vmem += 2 * g * s * s * jnp.dtype(probs_dtype).itemsize
        out_shape = (ctx_shape, jax.ShapeDtypeStruct((b, h, s, s), probs_dtype))
        out_specs = (ctx_spec, pl.BlockSpec((1, g, s, s), lambda i, j: (i, j, 0, 0)))
    else:
        out_shape = ctx_shape
        out_specs = ctx_spec

    res = pl.pallas_call(
        functools.partial(_attn_kernel, g=g, dh=dh, exp_dtype=exp_dtype),
        out_shape=out_shape,
        grid=grid,
        in_specs=[qkv_spec, qkv_spec, qkv_spec],
        out_specs=out_specs,
        compiler_params=pltpu.CompilerParams(
            dimension_semantics=("parallel", "parallel"),
            vmem_limit_bytes=_vmem_limit(vmem)),
    )(q, k, v)
    if vis:
        return res[0], res[1]
    return res, None


# ----------------------------------------------------------------------------
# Module wrapper
# ----------------------------------------------------------------------------
class AttentionStoreActivationPruneJAX:
    def __init__(self, hidden_size, num_heads, vis=True, seed=0, row_tile=256,
                 probs_dtype=jnp.float32):
        self.vis = vis
        self.num_heads = num_heads
        self.head_size = hidden_size // num_heads
        self.all_head_size = self.num_heads * self.head_size
        self.hidden_size = hidden_size
        self.row_tile = row_tile
        self.probs_dtype = probs_dtype
        # bf16 exp on v6e/v7x (EUP-bound softmax), f32 on v5 and older.
        self.exp_dtype = jnp.float32 if _is_pre_v6_tpu() else jnp.bfloat16

        key = jax.random.PRNGKey(seed)
        ks = jax.random.split(key, 8)
        bound = 1.0 / math.sqrt(hidden_size)   # PyTorch Linear default init range

        def mk_w(k):
            return jax.random.uniform(k, (hidden_size, hidden_size),
                                      jnp.float32, -bound, bound)

        def mk_b(k):
            return jax.random.uniform(k, (hidden_size,), jnp.float32, -bound, bound)

        # f32 "master" parameters (PyTorch convention: (out_features, in_features))
        self.wq, self.bq = mk_w(ks[0]), mk_b(ks[1])
        self.wk, self.bk = mk_w(ks[2]), mk_b(ks[3])
        self.wv, self.bv = mk_w(ks[4]), mk_b(ks[5])
        self.wo, self.bo = mk_w(ks[6]), mk_b(ks[7])

        # Fused, pre-transposed bf16 weights for the kernels.  The 1/sqrt(Dh)
        # attention scale is folded into the Q weight & bias (exact in f32).
        scale = 1.0 / math.sqrt(self.head_size)
        self.wqkv_t_bf16 = jnp.concatenate(
            [self.wq * scale, self.wk, self.wv], axis=0).T.astype(jnp.bfloat16)   # (D, 3D)
        self.bqkv = jnp.concatenate(
            [self.bq * scale, self.bk, self.bv]).reshape(1, -1)                   # (1, 3D) f32
        self.wo_t_bf16 = self.wo.T.astype(jnp.bfloat16)                           # (D, D)
        self.bo2 = self.bo.reshape(1, -1)                                         # (1, D) f32

    def __call__(self, hidden_states):
        b, s, d = hidden_states.shape
        x2d = hidden_states.reshape(b * s, d)

        # Fused QKV projection: activations read once, Q emitted pre-scaled.
        q, k, v = qkv_projection_pallas(x2d, self.wqkv_t_bf16, self.bqkv,
                                        row_tile=self.row_tile)
        q = q.reshape(b, s, d)          # pure reshapes, no relayout
        k = k.reshape(b, s, d)
        v = v.reshape(b, s, d)

        ctx, probs = attention_pallas(
            q, k, v, num_heads=self.num_heads, head_size=self.head_size,
            vis=self.vis, probs_dtype=self.probs_dtype, exp_dtype=self.exp_dtype)

        # ctx is already in (B, S, D) layout -> pure reshape to rows.
        ctx2d = ctx.reshape(b * s, d)
        out = linear_pallas(ctx2d, self.wo_t_bf16, self.bo2,
                            out_dtype=jnp.float32, row_tile=self.row_tile)
        out = out.reshape(b, s, d)
        weights = probs if self.vis else None
        # attn_dropout / proj_dropout: rate 0.0 -> identity.
        return out, weights


# ----------------------------------------------------------------------------
# Pure-JAX reference.  mxu_dtype=bf16 mirrors the kernels' mixed precision
# (bf16 MXU inputs, bf16 q/k/v & ctx intermediates, exp in mod.exp_dtype,
# f32 accumulation); mxu_dtype=f32 is the original full-precision module math.
# ----------------------------------------------------------------------------
def reference_forward(mod, hidden_states, mxu_dtype=jnp.float32):
    bf16 = mxu_dtype == jnp.bfloat16
    exp_dtype = mod.exp_dtype if bf16 else jnp.float32
    b, s, d = hidden_states.shape
    H, Dh = mod.num_heads, mod.head_size

    x2d = hidden_states.reshape(b * s, d).astype(mxu_dtype)

    def proj(w, bias):
        y = jnp.dot(x2d, w.T.astype(mxu_dtype),
                    preferred_element_type=jnp.float32) + bias
        return y.astype(jnp.bfloat16) if bf16 else y

    q = proj(mod.wq, mod.bq).reshape(b, s, H, Dh).transpose(0, 2, 1, 3)
    k = proj(mod.wk, mod.bk).reshape(b, s, H, Dh).transpose(0, 2, 1, 3)
    v = proj(mod.wv, mod.bv).reshape(b, s, H, Dh).transpose(0, 2, 1, 3)

    scores = jnp.einsum("bhqd,bhkd->bhqk", q.astype(mxu_dtype), k.astype(mxu_dtype),
                        preferred_element_type=jnp.float32) / math.sqrt(Dh)
    scores = scores - jnp.max(scores, axis=-1, keepdims=True)
    e = jnp.exp(scores.astype(exp_dtype)).astype(jnp.float32)
    probs = e * (1.0 / jnp.sum(e, axis=-1, keepdims=True))

    ctx = jnp.einsum("bhqk,bhkd->bhqd", probs.astype(mxu_dtype), v.astype(mxu_dtype),
                     preferred_element_type=jnp.float32)
    if bf16:
        ctx = ctx.astype(jnp.bfloat16)
    ctx2d = ctx.transpose(0, 2, 1, 3).reshape(b * s, d).astype(mxu_dtype)
    out = jnp.dot(ctx2d, mod.wo.T.astype(mxu_dtype),
                  preferred_element_type=jnp.float32) + mod.bo
    return out.reshape(b, s, d), probs


if __name__ == "__main__":
    B, S, HIDDEN, HEADS = 2, 8, 32, 4

    key = jax.random.PRNGKey(0)
    hidden_states = jax.random.normal(key, (B, S, HIDDEN), dtype=jnp.float32)

    mod = AttentionStoreActivationPruneJAX(HIDDEN, HEADS, vis=True, seed=0)

    out, weights = mod(hidden_states)
    out = jax.block_until_ready(out)
    weights = jax.block_until_ready(weights)

    # Tight check vs a reference mirroring the kernels' mixed precision.
    ref_out_bf, ref_w_bf = reference_forward(mod, hidden_states, jnp.bfloat16)
    assert jnp.allclose(out, ref_out_bf, atol=2e-2, rtol=2e-2), "output mismatch (bf16 ref)"
    assert jnp.allclose(weights, ref_w_bf, atol=2e-2, rtol=2e-2), "weights mismatch (bf16 ref)"

    # Loose check vs full-f32 module math (bf16 rounding is the only delta).
    ref_out, ref_w = reference_forward(mod, hidden_states, jnp.float32)
    assert jnp.allclose(out, ref_out, atol=1e-1, rtol=1e-1), "output mismatch (f32 ref)"
    assert jnp.allclose(weights, ref_w, atol=5e-2, rtol=5e-2), "weights mismatch (f32 ref)"

    print("KERNEL_OK")
</pallas_src>

<mosaic_0001>
module attributes {stable_mosaic.version = 11 : i64} {
  func.func @_qkv_kernel(%arg0: i32, %arg1: memref<16x32xf32, #tpu.memory_space<vmem>>, %arg2: memref<32x96xbf16, #tpu.memory_space<vmem>>, %arg3: memref<1x96xf32, #tpu.memory_space<vmem>>, %arg4: memref<16x32xbf16, #tpu.memory_space<vmem>>, %arg5: memref<16x32xbf16, #tpu.memory_space<vmem>>, %arg6: memref<16x32xbf16, #tpu.memory_space<vmem>>) attributes {dimension_semantics = [#tpu.dimension_semantics<parallel>], iteration_bounds = array<i64: 1>, scalar_prefetch = 0 : i64, scratch_operands = 0 : i64, tpu.core_type = #tpu.core_type<tc>, window_params = [{transform_indices = @transform_0, window_bounds = array<i64: 16, 32>}, {pipeline_mode = #tpu.pipeline_mode<synchronous>, transform_indices = @transform_1, window_bounds = array<i64: 32, 96>}, {pipeline_mode = #tpu.pipeline_mode<synchronous>, transform_indices = @transform_2, window_bounds = array<i64: 1, 96>}, {transform_indices = @transform_3, window_bounds = array<i64: 16, 32>}, {transform_indices = @transform_4, window_bounds = array<i64: 16, 32>}, {transform_indices = @transform_5, window_bounds = array<i64: 16, 32>}]} {
    %c0 = arith.constant 0 : index
    %c0_0 = arith.constant 0 : index
    %0 = vector.load %arg1[%c0, %c0_0] : memref<16x32xf32, #tpu.memory_space<vmem>>, vector<16x32xf32>
    %1 = arith.truncf %0 : vector<16x32xf32> to vector<16x32xbf16>
    %c0_1 = arith.constant 0 : index
    %c0_2 = arith.constant 0 : index
    %2 = vector.load %arg2[%c0_1, %c0_2] : memref<32x96xbf16, #tpu.memory_space<vmem>>, vector<32x96xbf16>
    %cst = arith.constant dense<0.000000e+00> : vector<16x96xf32>
    %3 = tpu.matmul %1, %2, %cst {dimension_numbers = #tpu.dot_dimension_numbers<[1], [0], [0], [1], [0, 0, 1, 1], [], []>} : vector<16x32xbf16>, vector<32x96xbf16>, vector<16x96xf32> -> vector<16x96xf32>
    %c0_3 = arith.constant 0 : index
    %c0_4 = arith.constant 0 : index
    %4 = vector.load %arg3[%c0_3, %c0_4] : memref<1x96xf32, #tpu.memory_space<vmem>>, vector<1x96xf32>
    %5 = vector.broadcast %4 : vector<1x96xf32> to vector<16x96xf32>
    %6 = arith.addf %3, %5 : vector<16x96xf32>
    %7 = vector.extract_strided_slice %6 {offsets = [0, 0], sizes = [16, 32], strides = [1, 1]} : vector<16x96xf32> to vector<16x32xf32>
    %8 = arith.truncf %7 : vector<16x32xf32> to vector<16x32xbf16>
    %c0_5 = arith.constant 0 : index
    %c0_6 = arith.constant 0 : index
    %9 = vector.load %arg4[%c0_5, %c0_6] : memref<16x32xbf16, #tpu.memory_space<vmem>>, vector<16x32xbf16>
    tpu.vector_store %arg4[%c0_5, %c0_6], %8 {strides = array<i32>} : memref<16x32xbf16, #tpu.memory_space<vmem>>, vector<16x32xbf16>,
    %10 = vector.extract_strided_slice %6 {offsets = [0, 32], sizes = [16, 32], strides = [1, 1]} : vector<16x96xf32> to vector<16x32xf32>
    %11 = arith.truncf %10 : vector<16x32xf32> to vector<16x32xbf16>
    %c0_7 = arith.constant 0 : index
    %c0_8 = arith.constant 0 : index
    %12 = vector.load %arg5[%c0_7, %c0_8] : memref<16x32xbf16, #tpu.memory_space<vmem>>, vector<16x32xbf16>
    tpu.vector_store %arg5[%c0_7, %c0_8], %11 {strides = array<i32>} : memref<16x32xbf16, #tpu.memory_space<vmem>>, vector<16x32xbf16>,
    %13 = vector.extract_strided_slice %6 {offsets = [0, 64], sizes = [16, 32], strides = [1, 1]} : vector<16x96xf32> to vector<16x32xf32>
    %14 = arith.truncf %13 : vector<16x32xf32> to vector<16x32xbf16>
    %c0_9 = arith.constant 0 : index
    %c0_10 = arith.constant 0 : index
    %15 = vector.load %arg6[%c0_9, %c0_10] : memref<16x32xbf16, #tpu.memory_space<vmem>>, vector<16x32xbf16>
    tpu.vector_store %arg6[%c0_9, %c0_10], %14 {strides = array<i32>} : memref<16x32xbf16, #tpu.memory_space<vmem>>, vector<16x32xbf16>,
    return
  }
  func.func @transform_0(%arg0: i32) -> (i32, i32) {
    %c0_i32 = arith.constant 0 : i32
    %c0_i32_0 = arith.constant 0 : i32
    return %arg0, %c0_i32 : i32, i32
  }
  func.func @transform_1(%arg0: i32) -> (i32, i32) {
    %c0_i32 = arith.constant 0 : i32
    %c0_i32_0 = arith.constant 0 : i32
    %c0_i32_1 = arith.constant 0 : i32
    return %c0_i32, %c0_i32_0 : i32, i32
  }
  func.func @transform_2(%arg0: i32) -> (i32, i32) {
    %c0_i32 = arith.constant 0 : i32
    %c0_i32_0 = arith.constant 0 : i32
    %c0_i32_1 = arith.constant 0 : i32
    return %c0_i32, %c0_i32_0 : i32, i32
  }
  func.func @transform_3(%arg0: i32) -> (i32, i32) {
    %c0_i32 = arith.constant 0 : i32
    %c0_i32_0 = arith.constant 0 : i32
    return %arg0, %c0_i32 : i32, i32
  }
  func.func @transform_4(%arg0: i32) -> (i32, i32) {
    %c0_i32 = arith.constant 0 : i32
    %c0_i32_0 = arith.constant 0 : i32
    return %arg0, %c0_i32 : i32, i32
  }
  func.func @transform_5(%arg0: i32) -> (i32, i32) {
    %c0_i32 = arith.constant 0 : i32
    %c0_i32_0 = arith.constant 0 : i32
    return %arg0, %c0_i32 : i32, i32
  }
}

</mosaic_0001>

<llo_original>
// kernel: tpu_custom_call.1
$region0: #{tpu_custom_call.1}
  #allocation0 [shape = 'u32[]', space=smem, size = 0x4, offset = 0x4, fixed_abs, tag = 'smem constant byte address 0x4 - core index']
  #allocation1 [shape = 'u32[144,128]{1,0:T(1,128)}', space=vmem, size = 0x12000, scoped, tag = 'internal scratch']
  %s0 = inlined_call_operand.hbm [shape: f32[16,32], index: 0, kind: input, shape index: {}]
  %s1 = inlined_call_operand.hbm [shape: bf16[32,96], index: 1, kind: input, shape index: {}]
  %s2 = inlined_call_operand.vmem [shape: f32[1,96], index: 2, kind: input, shape index: {}]
  %s3 = inlined_call_operand.hbm [shape: bf16[16,32], index: 3, kind: output, shape index: {0}]
  %s4 = inlined_call_operand.hbm [shape: bf16[16,32], index: 4, kind: output, shape index: {1}]
  %s5 = inlined_call_operand.hbm [shape: bf16[16,32], index: 5, kind: output, shape index: {2}]
  %6 = xla_tuple %s3, %s4, %s5
  %s7 = sld [smem:[#allocation0]]
  $region46: #{tpu_custom_call.1} parent=0
    _
  %s9 = ssub.s32 1, %s7
  %s10 = scalar_select 0, %s9, %s7
  $region1: #{tpu_custom_call.1} parent=0
    #allocation2 [shape = 'u8[8192]{0}', space=vmem, size = 0x2000, scoped, tag = 'input window, operand 0, single buffered']
    #allocation3 [shape = 's32[1]{0}', space=sflag, size = 0x4, scoped, tag = 'scoped memory for tpu_custom_call.1']
    #allocation4 [shape = 's32[1]{0}', space=sflag, size = 0x4, scoped, tag = 'scoped memory for tpu_custom_call.1']
    #allocation5 [shape = 'u8[8192]{0}', space=vmem, size = 0x2000, scoped, tag = 'input window, operand 1, single buffered']
    #allocation6 [shape = 's32[1]{0}', space=sflag, size = 0x4, scoped, tag = 'scoped memory for tpu_custom_call.1']
    #allocation7 [shape = 'u8[4096]{0}', space=vmem, size = 0x1000, scoped, tag = 'output window, operand 0, single buffered']
    #allocation8 [shape = 'u8[4096]{0}', space=vmem, size = 0x1000, scoped, tag = 'output window, operand 1, single buffered']
    #allocation9 [shape = 's32[1]{0}', space=sflag, size = 0x4, scoped, tag = 'scoped memory for tpu_custom_call.1']
    #allocation10 [shape = 'u8[4096]{0}', space=vmem, size = 0x1000, scoped, tag = 'output window, operand 2, single buffered']
    %11 = vsyncpa [#allocation3], 0
    %12 = vsyncpa [#allocation6], 0
    %13 = vsyncpa [#allocation4], 0
    %14 = vsyncpa [#allocation9], 0
    // Predicated region
    $region2: #{tpu_custom_call.1} parent=1 // pred_check
      _
    $region3: #{tpu_custom_call.1} parent=1 // pred_check_branch
      %16 = sbr.rel (0) target = $region5
    $region4: #{tpu_custom_call.1} parent=1 // pred_region
      %s18 = ssub.s32 256, 256
      %19 = vsyncadd [#allocation3], %s18
      %s20 = sshll.u32 [#allocation2], 4
      %s21 = int_to_ptr.vmem [resolvable:$true] %s20
      %26 = dma.hbm_to_vmem [thread:$0]  %s0, 256, %s21, [#allocation3], 128, 128, 8
    $region5: #{tpu_custom_call.1} parent=1 // pred_fallthru
      _
    // Predicated region
    $region6: #{tpu_custom_call.1} parent=1 // pred_check
      _
    $region7: #{tpu_custom_call.1} parent=1 // pred_check_branch
      %28 = sbr.rel (0) target = $region9
    $region8: #{tpu_custom_call.1} parent=1 // pred_region
      %s30 = ssub.s32 256, 256
      %31 = vsyncadd [#allocation6], %s30
      %s32 = sshll.u32 [#allocation5], 4
      %s33 = int_to_ptr.vmem [resolvable:$true] %s32
      %38 = dma.hbm_to_vmem [thread:$0]  %s1, 256, %s33, [#allocation6], 64, 64, 4
    $region9: #{tpu_custom_call.1} parent=1 // pred_fallthru
      _
    // Predicated region
    $region10: #{tpu_custom_call.1} parent=1 // pred_check
      _
    $region11: #{tpu_custom_call.1} parent=1 // pred_check_branch
      %40 = sbr.rel (0) target = $region13
    $region12: #{tpu_custom_call.1} parent=1 // pred_region
      _
    $region13: #{tpu_custom_call.1} parent=1 // pred_fallthru
      _
    // Predicated region
    $region14: #{tpu_custom_call.1} parent=1 // pred_check
      _
    $region15: #{tpu_custom_call.1} parent=1 // pred_check_branch
      %42 = sbr.rel (0) target = $region17
    $region16: #{tpu_custom_call.1} parent=1 // pred_region
      %43 = dma.done [#allocation3], 256
    $region17: #{tpu_custom_call.1} parent=1 // pred_fallthru
      _
    // Predicated region
    $region18: #{tpu_custom_call.1} parent=1 // pred_check
      _
    $region19: #{tpu_custom_call.1} parent=1 // pred_check_branch
      %45 = sbr.rel (0) target = $region21
    $region20: #{tpu_custom_call.1} parent=1 // pred_region
      %46 = dma.done [#allocation6], 256
    $region21: #{tpu_custom_call.1} parent=1 // pred_fallthru
      _
    %v48 = vld [vmem:[#allocation2] sm:$0xff]
    %v49 = vld [vmem:[#allocation2 + $0x8] sm:$0xff]
    %v50 = vpack.c.bf16 %v49, %v48
    %v51 = vld [vmem:[#allocation5] sm:$0xf]
    %v52 = vld [vmem:[#allocation5 + $0x4] sm:$0xf]
    %v53 = vld [vmem:[#allocation5 + $0x8] sm:$0xf]
    %v54 = vld [vmem:[#allocation5 + $0xc] sm:$0xf]
    %v55 = vld [vmem:[%s2] sm:$0x1]
    %v57 = vlaneseq
    %v58 = vshrl.u32 %v57, 7
    %v59 = vsub.s32 0, %v58
    %v60 = vrot.slane %v55, %v59
    %v66 = vunpack.c.l.b16 %v51
    %v67 = vunpack.c.l.b16 %v52
    %v68 = vunpack.c.l.b16 %v53
    %v69 = vunpack.c.l.b16 %v54
    %v70 = vpack.c.b16 %v67, %v66
    %v71 = vpack.c.b16 %v69, %v68
    %vm74 = vcmask 261120
    %v76 = vsel %vm74, %v50, 0
    %78 = vmatprep.subr.bf16.mxu0 0
    %79 = vmatpush1.bf16.msra.mxu0 0
    %80 = vmatprep.subr.bf16.mxu0 0
    %81 = vmatpush1.bf16.msra.mxu0 0
    %82 = vmatprep.subr.bf16.mxu0 0
    %83 = vmatpush1.bf16.msra.mxu0 0
    %84 = vmatprep.subr.bf16.mxu0 0
    %85 = vmatpush1.bf16.msra.mxu0 0
    %86 = vmatprep.subr.bf16.mxu0 0
    %87 = vmatpush1.bf16.msra.mxu0 0
    %88 = vmatprep.subr.bf16.mxu0 0
    %89 = vmatpush1.bf16.msra.mxu0 0
    %90 = vmatprep.subr.bf16.mxu0 0
    %91 = vmatpush1.bf16.msra.mxu0 %v71
    %92 = vmatprep.subr.bf16.mxu0 0
    %93 = vmatpush1.bf16.msra.mxu0 %v70
    %94 = vmatprep.subr.bf16.mxu0 0
    %95 = vmatpush2.bf16.msra.mxu0 0
    %96 = vmatprep.subr.bf16.mxu0 0
    %97 = vmatpush2.bf16.msra.mxu0 0
    %98 = vmatprep.subr.bf16.mxu0 0
    %99 = vmatpush2.bf16.msra.mxu0 0
    %100 = vmatprep.subr.bf16.mxu0 0
    %101 = vmatpush2.bf16.msra.mxu0 0
    %102 = vmatprep.subr.bf16.mxu0 0
    %103 = vmatpush2.bf16.msra.mxu0 0
    %104 = vmatprep.subr.bf16.mxu0 0
    %105 = vmatpush2.bf16.msra.mxu0 0
    %106 = vmatprep.subr.bf16.mxu0 0
    %107 = vmatpush2.bf16.msra.mxu0 0
    %108 = vmatprep.subr.bf16.mxu0 0
    %109 = vmatpush2.bf16.msra.mxu0 0
    %110 = vmatprep.mubr.bf16.mxu0 0
    %111 = vmatmul.mubr.bf16.gmra.mxu0 %v76
    %v112 = vpop.f32.mrf.mxu0
    %v113 = vadd.f32 %v60, %v112
    %v114 = vpop.f32.mrf.mxu0
    %v115 = vpop.f32.mrf.mxu0
    %v116 = vadd.f32 %v60, %v115
    %v117 = vpop.f32.mrf.mxu0
    %118 = vdwg.mxu0
    %v119 = vpack.c.bf16 %v116, %v113
    %v121 = vunpack.c.l.b16 %v119
    %v122 = vunpack.c.h.b16 %v119
    %v123 = vpack.c.b16 %v121, %v121
    %v124 = vpack.c.b16 %v122, %v122
    %vm127 = vcmask 257024
    %128 = vst.msk [vmem:[#allocation7] sm:$0xf] %vm127, %v123
    %129 = vst.msk [vmem:[#allocation7 + $0x4] sm:$0xf] %vm127, %v124
    %130 = vrot.lane.b32.xlu0 %v123, 96
    %v131 = vpop.permute.xlu0 %130
    %132 = vrot.lane.b32.xlu0 %v124, 96
    %v133 = vpop.permute.xlu0 %132
    %136 = vst.msk [vmem:[#allocation8] sm:$0xf] %vm127, %v131
    %137 = vst.msk [vmem:[#allocation8 + $0x4] sm:$0xf] %vm127, %v133
    %138 = vrot.lane.b32.xlu0 %v123, 64
    %v139 = vpop.permute.xlu0 %138
    %140 = vrot.lane.b32.xlu0 %v124, 64
    %v141 = vpop.permute.xlu0 %140
    %144 = vst.msk [vmem:[#allocation10] sm:$0xf] %vm127, %v139
    %145 = vst.msk [vmem:[#allocation10 + $0x4] sm:$0xf] %vm127, %v141
    // Predicated region
    $region22: #{tpu_custom_call.1} parent=1 // pred_check
      _
    $region23: #{tpu_custom_call.1} parent=1 // pred_check_branch
      %147 = sbr.rel (0) target = $region25
    $region24: #{tpu_custom_call.1} parent=1 // pred_region
      %s149 = ssub.s32 128, 128
      %150 = vsyncadd [#allocation4], %s149
      %s151 = sshll.u32 [#allocation7], 4
      %s152 = int_to_ptr.vmem [resolvable:$true] %s151
      %157 = dma.vmem_to_hbm [thread:$0]  %s152, 128, %s3, [#allocation4], 64, 64, 4
    $region25: #{tpu_custom_call.1} parent=1 // pred_fallthru
      _
    // Predicated region
    $region26: #{tpu_custom_call.1} parent=1 // pred_check
      _
    $region27: #{tpu_custom_call.1} parent=1 // pred_check_branch
      %159 = sbr.rel (0) target = $region29
    $region28: #{tpu_custom_call.1} parent=1 // pred_region
      %s161 = ssub.s32 128, 128
      %162 = vsyncadd [#allocation9], %s161
      %s163 = sshll.u32 [#allocation8], 4
      %s164 = int_to_ptr.vmem [resolvable:$true] %s163
      %169 = dma.vmem_to_hbm [thread:$0]  %s164, 128, %s4, [#allocation9], 64, 64, 4
    $region29: #{tpu_custom_call.1} parent=1 // pred_fallthru
      _
    // Predicated region
    $region30: #{tpu_custom_call.1} parent=1 // pred_check
      _
    $region31: #{tpu_custom_call.1} parent=1 // pred_check_branch
      %171 = sbr.rel (0) target = $region33
    $region32: #{tpu_custom_call.1} parent=1 // pred_region
      %s173 = ssub.s32 128, 128
      %174 = vsyncadd [#allocation9], %s173
      %s175 = sshll.u32 [#allocation10], 4
      %s176 = int_to_ptr.vmem [resolvable:$true] %s175
      %181 = dma.vmem_to_hbm [thread:$0]  %s176, 128, %s5, [#allocation9], 64, 64, 4
    $region33: #{tpu_custom_call.1} parent=1 // pred_fallthru
      _
    // Predicated region
    $region34: #{tpu_custom_call.1} parent=1 // pred_check
      _
    $region35: #{tpu_custom_call.1} parent=1 // pred_check_branch
      %183 = sbr.rel (0) target = $region37
    $region36: #{tpu_custom_call.1} parent=1 // pred_region
      %184 = dma.done [#allocation4], 128
    $region37: #{tpu_custom_call.1} parent=1 // pred_fallthru
      _
    // Predicated region
    $region38: #{tpu_custom_call.1} parent=1 // pred_check
      _
    $region39: #{tpu_custom_call.1} parent=1 // pred_check_branch
      %186 = sbr.rel (0) target = $region41
    $region40: #{tpu_custom_call.1} parent=1 // pred_region
      %187 = dma.done [#allocation9], 128
    $region41: #{tpu_custom_call.1} parent=1 // pred_fallthru
      _
    // Predicated region
    $region42: #{tpu_custom_call.1} parent=1 // pred_check
      _
    $region43: #{tpu_custom_call.1} parent=1 // pred_check_branch
      %189 = sbr.rel (0) target = $region45
    $region44: #{tpu_custom_call.1} parent=1 // pred_region
      %190 = dma.done [#allocation9], 128
    $region45: #{tpu_custom_call.1} parent=1 // pred_fallthru
      _
    %191 = vsyncpa [#allocation3], 1
    %192 = vsyncpa [#allocation6], 1
    %193 = vsyncpa [#allocation4], 1
    %194 = vsyncpa [#allocation9], 1

</llo_original>
